<compile_context>
chip_gen: v7x
topology: tpu7x:2x2x1
jax: 0.10.0
libtpu: 0.0.40
codegen_flags: <defaults>
</compile_context>

<pallas_src>
import jax
import jax.numpy as jnp
from jax.experimental import pallas as pl
from jax.experimental.pallas import tpu as pltpu


def _round_up(x: int, m: int) -> int:
    return (x + m - 1) // m * m


def _word_emb_gather_kernel(ids_ref, tbl_hbm, b_ref, out_ref, buf, sems):
    """Gather fused-embedding rows for one tile of tokens and add the reducer bias.

    ids_ref : (Np,)   int32  SMEM   scalar-prefetched token ids (padded)
    tbl_hbm : (V, R)  f32    HBM    fused table F = E @ W^T   (never copied whole)
    b_ref   : (1, R)  f32    VMEM   reducer bias (grid-invariant)
    out_ref : (T, R)  f32    VMEM   output tile
    buf     : (T, R)  f32    VMEM   staging buffer for the row DMAs
    sems    : (T,)    DMA semaphores
    """
    tile = out_ref.shape[0]
    num_rows = tbl_hbm.shape[0]
    base = pl.program_id(0) * tile

    # Issue every row DMA of this tile first (they overlap), then wait for each.
    copies = []
    for t in range(tile):  # static, small trip count (<= token_tile)
        row = jnp.clip(ids_ref[base + t], 0, num_rows - 1)
        cp = pltpu.make_async_copy(
            tbl_hbm.at[pl.ds(row, 1), :],
            buf.at[pl.ds(t, 1), :],
            sems.at[t],
        )
        cp.start()
        copies.append(cp)
    for cp in copies:
        cp.wait()

    out_ref[...] = buf[...] + b_ref[...]


def init_word_embeddings(emb_table, w, b):
    """One-time (module init) fusion of the embedding table with the reducer.

    emb_table: (V, D) f32   nn.Embedding weight
    w:         (R, D) f32   nn.Linear weight (torch layout)
    b:         (R,)   f32   nn.Linear bias
    returns   (fused_table (V, R) f32, bias (1, R) f32)

    This V*D*R matmul is hoisted out of the forward path; HIGHEST precision is fine
    here because it runs once per model, not once per call.
    """
    fused = jnp.dot(
        emb_table.astype(jnp.float32),
        w.astype(jnp.float32).T,
        preferred_element_type=jnp.float32,
        precision=jax.lax.Precision.HIGHEST,
    )
    return fused, b.astype(jnp.float32).reshape(1, -1)


def word_embeddings_forward(token_ids, fused_table, bias, *, token_tile=64):
    """Pallas equivalent of WordEmbeddings.forward.

    token_ids:   (B, S) int32
    fused_table: (V, R) f32   from init_word_embeddings (cached; NOT recomputed here)
    bias:        (1, R) f32
    returns:     (B, S, R) f32
    """
    B, S = token_ids.shape
    N = B * S
    V, R = fused_table.shape

    # Adaptive token tile: multiple of 8 sublanes; prefer >=2 grid steps when there is
    # enough work so the "parallel" axis can shard across TensorCores.
    token_tile = max(8, _round_up(token_tile, 8))
    n8 = _round_up(N, 8)
    tile = min(token_tile, n8)
    if n8 // tile < 2 and n8 >= 16:
        tile = _round_up(n8 // 2, 8)
    n_pad = _round_up(N, tile)

    # Padded ids reuse id 0; the extra rows are sliced off below.
    ids = jnp.pad(token_ids.reshape(N).astype(jnp.int32), (0, n_pad - N))

    out = pl.pallas_call(
        _word_emb_gather_kernel,
        out_shape=jax.ShapeDtypeStruct((n_pad, R), jnp.float32),
        grid_spec=pltpu.PrefetchScalarGridSpec(
            num_scalar_prefetch=1,                       # ids -> SMEM
            grid=(n_pad // tile,),
            in_specs=[
                pl.BlockSpec(memory_space=pl.ANY),           # fused table stays in HBM
                pl.BlockSpec((1, R), lambda i, _ids: (0, 0)),  # bias (tiny, resident)
            ],
            out_specs=pl.BlockSpec((tile, R), lambda i, _ids: (i, 0)),
            scratch_shapes=[
                pltpu.VMEM((tile, R), jnp.float32),
                pltpu.SemaphoreType.DMA((tile,)),
            ],
        ),
        compiler_params=pltpu.CompilerParams(
            dimension_semantics=("parallel",),
        ),
    )(ids, fused_table, bias)

    return out[:N].reshape(B, S, R)


if __name__ == "__main__":
    # Small shapes consistent with the module defaults:
    # vector_size=100 (D), reduced_dim=32 (R), small vocab, batch of sequences.
    B, S = 2, 8          # batch of token-index sequences
    V = 64               # num_embeddings (vocab)
    D = 100              # vector_size
    R = 32               # reduced_dim

    key = jax.random.PRNGKey(0)
    k_emb, k_w, k_b, k_ids = jax.random.split(key, 4)

    emb_table = jax.random.normal(k_emb, (V, D), dtype=jnp.float32)
    # torch nn.Linear(D, R): weight layout (R, D).
    w = jax.random.normal(k_w, (R, D), dtype=jnp.float32) * (1.0 / jnp.sqrt(D))
    b = jax.random.normal(k_b, (R,), dtype=jnp.float32) * 0.01
    token_ids = jax.random.randint(k_ids, (B, S), minval=0, maxval=V, dtype=jnp.int32)

    # One-time fusion (cache per model; NOT on the per-call path).
    fused_table, bias = init_word_embeddings(emb_table, w, b)
    fused_table = jax.block_until_ready(fused_table)
    bias = jax.block_until_ready(bias)

    out = word_embeddings_forward(token_ids, fused_table, bias)
    out = jax.block_until_ready(out)

    # Reference (plain JAX, same semantics as the torch module): lookup then linear.
    ref = (
        jnp.einsum(
            "bsd,rd->bsr",
            jnp.take(emb_table, token_ids, axis=0),
            w,
            preferred_element_type=jnp.float32,
            precision=jax.lax.Precision.HIGHEST,
        )
        + b
    )
    assert out.shape == (B, S, R), out.shape
    assert jnp.allclose(out, ref, atol=1e-4, rtol=1e-4), "mismatch vs reference"

    print("KERNEL_OK")
</pallas_src>

<mosaic_0001>
module attributes {stable_mosaic.version = 11 : i64} {
  func.func @_word_emb_gather_kernel(%arg0: i32, %arg1: memref<16xi32, #tpu.memory_space<smem>>, %arg2: memref<64x32xf32, #tpu.memory_space<any>>, %arg3: memref<1x32xf32, #tpu.memory_space<vmem>>, %arg4: memref<8x32xf32, #tpu.memory_space<vmem>>, %arg5: memref<8x32xf32, #tpu.memory_space<vmem>>, %arg6: memref<8x!tpu.dma_semaphore, #tpu.memory_space<semaphore_mem>>) attributes {dimension_semantics = [#tpu.dimension_semantics<parallel>], iteration_bounds = array<i64: 2>, scalar_prefetch = 1 : i64, scratch_operands = 2 : i64, tpu.core_type = #tpu.core_type<tc>, window_params = [{}, {pipeline_mode = #tpu.pipeline_mode<synchronous>, transform_indices = @transform_1, window_bounds = array<i64: 1, 32>}, {transform_indices = @transform_2, window_bounds = array<i64: 8, 32>}]} {
    %c8_i32 = arith.constant 8 : i32
    %0 = arith.muli %arg0, %c8_i32 : i32
    %c0_i32 = arith.constant 0 : i32
    %1 = arith.addi %0, %c0_i32 : i32
    %2 = arith.index_cast %1 : i32 to index
    %3 = memref.load %arg1[%2] : memref<16xi32, #tpu.memory_space<smem>>
    %c0_i32_0 = arith.constant 0 : i32
    %c63_i32 = arith.constant 63 : i32
    %4 = arith.maxsi %c0_i32_0, %3 : i32
    %5 = arith.minsi %c63_i32, %4 : i32
    %c0_i32_1 = arith.constant 0 : i32
    %c0_i32_2 = arith.constant 0 : i32
    %6 = tpu.memref_slice %arg2[%5, %c0_i32_2] : memref<64x32xf32, #tpu.memory_space<any>> -> memref<1x32xf32, #tpu.memory_space<any>>
    %c0_i32_3 = arith.constant 0 : i32
    %c0_i32_4 = arith.constant 0 : i32
    %7 = tpu.memref_slice %arg5[%c0_i32_3, %c0_i32_4] : memref<8x32xf32, #tpu.memory_space<vmem>> -> memref<1x32xf32, #tpu.memory_space<vmem>>
    %8 = tpu.memref_slice %arg6[%c0_i32_1] : memref<8x!tpu.dma_semaphore, #tpu.memory_space<semaphore_mem>> -> memref<1x!tpu.dma_semaphore, #tpu.memory_space<semaphore_mem>>
    %9 = tpu.memref_squeeze %8 : memref<1x!tpu.dma_semaphore, #tpu.memory_space<semaphore_mem>> -> memref<!tpu.dma_semaphore, #tpu.memory_space<semaphore_mem>>
    tpu.enqueue_dma source(%6 : memref<1x32xf32, #tpu.memory_space<any>>) target(%7 : memref<1x32xf32, #tpu.memory_space<vmem>>) target_semaphore(%9 : memref<!tpu.dma_semaphore, #tpu.memory_space<semaphore_mem>>)
    %c1_i32 = arith.constant 1 : i32
    %10 = arith.addi %0, %c1_i32 : i32
    %11 = arith.index_cast %10 : i32 to index
    %12 = memref.load %arg1[%11] : memref<16xi32, #tpu.memory_space<smem>>
    %c0_i32_5 = arith.constant 0 : i32
    %c63_i32_6 = arith.constant 63 : i32
    %13 = arith.maxsi %c0_i32_5, %12 : i32
    %14 = arith.minsi %c63_i32_6, %13 : i32
    %c1_i32_7 = arith.constant 1 : i32
    %c0_i32_8 = arith.constant 0 : i32
    %15 = tpu.memref_slice %arg2[%14, %c0_i32_8] : memref<64x32xf32, #tpu.memory_space<any>> -> memref<1x32xf32, #tpu.memory_space<any>>
    %c1_i32_9 = arith.constant 1 : i32
    %c0_i32_10 = arith.constant 0 : i32
    %16 = tpu.memref_slice %arg5[%c1_i32_9, %c0_i32_10] : memref<8x32xf32, #tpu.memory_space<vmem>> -> memref<1x32xf32, #tpu.memory_space<vmem>>
    %17 = tpu.memref_slice %arg6[%c1_i32_7] : memref<8x!tpu.dma_semaphore, #tpu.memory_space<semaphore_mem>> -> memref<1x!tpu.dma_semaphore, #tpu.memory_space<semaphore_mem>>
    %18 = tpu.memref_squeeze %17 : memref<1x!tpu.dma_semaphore, #tpu.memory_space<semaphore_mem>> -> memref<!tpu.dma_semaphore, #tpu.memory_space<semaphore_mem>>
    tpu.enqueue_dma source(%15 : memref<1x32xf32, #tpu.memory_space<any>>) target(%16 : memref<1x32xf32, #tpu.memory_space<vmem>>) target_semaphore(%18 : memref<!tpu.dma_semaphore, #tpu.memory_space<semaphore_mem>>)
    %c2_i32 = arith.constant 2 : i32
    %19 = arith.addi %0, %c2_i32 : i32
    %20 = arith.index_cast %19 : i32 to index
    %21 = memref.load %arg1[%20] : memref<16xi32, #tpu.memory_space<smem>>
    %c0_i32_11 = arith.constant 0 : i32
    %c63_i32_12 = arith.constant 63 : i32
    %22 = arith.maxsi %c0_i32_11, %21 : i32
    %23 = arith.minsi %c63_i32_12, %22 : i32
    %c2_i32_13 = arith.constant 2 : i32
    %c0_i32_14 = arith.constant 0 : i32
    %24 = tpu.memref_slice %arg2[%23, %c0_i32_14] : memref<64x32xf32, #tpu.memory_space<any>> -> memref<1x32xf32, #tpu.memory_space<any>>
    %c2_i32_15 = arith.constant 2 : i32
    %c0_i32_16 = arith.constant 0 : i32
    %25 = tpu.memref_slice %arg5[%c2_i32_15, %c0_i32_16] : memref<8x32xf32, #tpu.memory_space<vmem>> -> memref<1x32xf32, #tpu.memory_space<vmem>>
    %26 = tpu.memref_slice %arg6[%c2_i32_13] : memref<8x!tpu.dma_semaphore, #tpu.memory_space<semaphore_mem>> -> memref<1x!tpu.dma_semaphore, #tpu.memory_space<semaphore_mem>>
    %27 = tpu.memref_squeeze %26 : memref<1x!tpu.dma_semaphore, #tpu.memory_space<semaphore_mem>> -> memref<!tpu.dma_semaphore, #tpu.memory_space<semaphore_mem>>
    tpu.enqueue_dma source(%24 : memref<1x32xf32, #tpu.memory_space<any>>) target(%25 : memref<1x32xf32, #tpu.memory_space<vmem>>) target_semaphore(%27 : memref<!tpu.dma_semaphore, #tpu.memory_space<semaphore_mem>>)
    %c3_i32 = arith.constant 3 : i32
    %28 = arith.addi %0, %c3_i32 : i32
    %29 = arith.index_cast %28 : i32 to index
    %30 = memref.load %arg1[%29] : memref<16xi32, #tpu.memory_space<smem>>
    %c0_i32_17 = arith.constant 0 : i32
    %c63_i32_18 = arith.constant 63 : i32
    %31 = arith.maxsi %c0_i32_17, %30 : i32
    %32 = arith.minsi %c63_i32_18, %31 : i32
    %c3_i32_19 = arith.constant 3 : i32
    %c0_i32_20 = arith.constant 0 : i32
    %33 = tpu.memref_slice %arg2[%32, %c0_i32_20] : memref<64x32xf32, #tpu.memory_space<any>> -> memref<1x32xf32, #tpu.memory_space<any>>
    %c3_i32_21 = arith.constant 3 : i32
    %c0_i32_22 = arith.constant 0 : i32
    %34 = tpu.memref_slice %arg5[%c3_i32_21, %c0_i32_22] : memref<8x32xf32, #tpu.memory_space<vmem>> -> memref<1x32xf32, #tpu.memory_space<vmem>>
    %35 = tpu.memref_slice %arg6[%c3_i32_19] : memref<8x!tpu.dma_semaphore, #tpu.memory_space<semaphore_mem>> -> memref<1x!tpu.dma_semaphore, #tpu.memory_space<semaphore_mem>>
    %36 = tpu.memref_squeeze %35 : memref<1x!tpu.dma_semaphore, #tpu.memory_space<semaphore_mem>> -> memref<!tpu.dma_semaphore, #tpu.memory_space<semaphore_mem>>
    tpu.enqueue_dma source(%33 : memref<1x32xf32, #tpu.memory_space<any>>) target(%34 : memref<1x32xf32, #tpu.memory_space<vmem>>) target_semaphore(%36 : memref<!tpu.dma_semaphore, #tpu.memory_space<semaphore_mem>>)
    %c4_i32 = arith.constant 4 : i32
    %37 = arith.addi %0, %c4_i32 : i32
    %38 = arith.index_cast %37 : i32 to index
    %39 = memref.load %arg1[%38] : memref<16xi32, #tpu.memory_space<smem>>
    %c0_i32_23 = arith.constant 0 : i32
    %c63_i32_24 = arith.constant 63 : i32
    %40 = arith.maxsi %c0_i32_23, %39 : i32
    %41 = arith.minsi %c63_i32_24, %40 : i32
    %c4_i32_25 = arith.constant 4 : i32
    %c0_i32_26 = arith.constant 0 : i32
    %42 = tpu.memref_slice %arg2[%41, %c0_i32_26] : memref<64x32xf32, #tpu.memory_space<any>> -> memref<1x32xf32, #tpu.memory_space<any>>
    %c4_i32_27 = arith.constant 4 : i32
    %c0_i32_28 = arith.constant 0 : i32
    %43 = tpu.memref_slice %arg5[%c4_i32_27, %c0_i32_28] : memref<8x32xf32, #tpu.memory_space<vmem>> -> memref<1x32xf32, #tpu.memory_space<vmem>>
    %44 = tpu.memref_slice %arg6[%c4_i32_25] : memref<8x!tpu.dma_semaphore, #tpu.memory_space<semaphore_mem>> -> memref<1x!tpu.dma_semaphore, #tpu.memory_space<semaphore_mem>>
    %45 = tpu.memref_squeeze %44 : memref<1x!tpu.dma_semaphore, #tpu.memory_space<semaphore_mem>> -> memref<!tpu.dma_semaphore, #tpu.memory_space<semaphore_mem>>
    tpu.enqueue_dma source(%42 : memref<1x32xf32, #tpu.memory_space<any>>) target(%43 : memref<1x32xf32, #tpu.memory_space<vmem>>) target_semaphore(%45 : memref<!tpu.dma_semaphore, #tpu.memory_space<semaphore_mem>>)
    %c5_i32 = arith.constant 5 : i32
    %46 = arith.addi %0, %c5_i32 : i32
    %47 = arith.index_cast %46 : i32 to index
    %48 = memref.load %arg1[%47] : memref<16xi32, #tpu.memory_space<smem>>
    %c0_i32_29 = arith.constant 0 : i32
    %c63_i32_30 = arith.constant 63 : i32
    %49 = arith.maxsi %c0_i32_29, %48 : i32
    %50 = arith.minsi %c63_i32_30, %49 : i32
    %c5_i32_31 = arith.constant 5 : i32
    %c0_i32_32 = arith.constant 0 : i32
    %51 = tpu.memref_slice %arg2[%50, %c0_i32_32] : memref<64x32xf32, #tpu.memory_space<any>> -> memref<1x32xf32, #tpu.memory_space<any>>
    %c5_i32_33 = arith.constant 5 : i32
    %c0_i32_34 = arith.constant 0 : i32
    %52 = tpu.memref_slice %arg5[%c5_i32_33, %c0_i32_34] : memref<8x32xf32, #tpu.memory_space<vmem>> -> memref<1x32xf32, #tpu.memory_space<vmem>>
    %53 = tpu.memref_slice %arg6[%c5_i32_31] : memref<8x!tpu.dma_semaphore, #tpu.memory_space<semaphore_mem>> -> memref<1x!tpu.dma_semaphore, #tpu.memory_space<semaphore_mem>>
    %54 = tpu.memref_squeeze %53 : memref<1x!tpu.dma_semaphore, #tpu.memory_space<semaphore_mem>> -> memref<!tpu.dma_semaphore, #tpu.memory_space<semaphore_mem>>
    tpu.enqueue_dma source(%51 : memref<1x32xf32, #tpu.memory_space<any>>) target(%52 : memref<1x32xf32, #tpu.memory_space<vmem>>) target_semaphore(%54 : memref<!tpu.dma_semaphore, #tpu.memory_space<semaphore_mem>>)
    %c6_i32 = arith.constant 6 : i32
    %55 = arith.addi %0, %c6_i32 : i32
    %56 = arith.index_cast %55 : i32 to index
    %57 = memref.load %arg1[%56] : memref<16xi32, #tpu.memory_space<smem>>
    %c0_i32_35 = arith.constant 0 : i32
    %c63_i32_36 = arith.constant 63 : i32
    %58 = arith.maxsi %c0_i32_35, %57 : i32
    %59 = arith.minsi %c63_i32_36, %58 : i32
    %c6_i32_37 = arith.constant 6 : i32
    %c0_i32_38 = arith.constant 0 : i32
    %60 = tpu.memref_slice %arg2[%59, %c0_i32_38] : memref<64x32xf32, #tpu.memory_space<any>> -> memref<1x32xf32, #tpu.memory_space<any>>
    %c6_i32_39 = arith.constant 6 : i32
    %c0_i32_40 = arith.constant 0 : i32
    %61 = tpu.memref_slice %arg5[%c6_i32_39, %c0_i32_40] : memref<8x32xf32, #tpu.memory_space<vmem>> -> memref<1x32xf32, #tpu.memory_space<vmem>>
    %62 = tpu.memref_slice %arg6[%c6_i32_37] : memref<8x!tpu.dma_semaphore, #tpu.memory_space<semaphore_mem>> -> memref<1x!tpu.dma_semaphore, #tpu.memory_space<semaphore_mem>>
    %63 = tpu.memref_squeeze %62 : memref<1x!tpu.dma_semaphore, #tpu.memory_space<semaphore_mem>> -> memref<!tpu.dma_semaphore, #tpu.memory_space<semaphore_mem>>
    tpu.enqueue_dma source(%60 : memref<1x32xf32, #tpu.memory_space<any>>) target(%61 : memref<1x32xf32, #tpu.memory_space<vmem>>) target_semaphore(%63 : memref<!tpu.dma_semaphore, #tpu.memory_space<semaphore_mem>>)
    %c7_i32 = arith.constant 7 : i32
    %64 = arith.addi %0, %c7_i32 : i32
    %65 = arith.index_cast %64 : i32 to index
    %66 = memref.load %arg1[%65] : memref<16xi32, #tpu.memory_space<smem>>
    %c0_i32_41 = arith.constant 0 : i32
    %c63_i32_42 = arith.constant 63 : i32
    %67 = arith.maxsi %c0_i32_41, %66 : i32
    %68 = arith.minsi %c63_i32_42, %67 : i32
    %c7_i32_43 = arith.constant 7 : i32
    %c0_i32_44 = arith.constant 0 : i32
    %69 = tpu.memref_slice %arg2[%68, %c0_i32_44] : memref<64x32xf32, #tpu.memory_space<any>> -> memref<1x32xf32, #tpu.memory_space<any>>
    %c7_i32_45 = arith.constant 7 : i32
    %c0_i32_46 = arith.constant 0 : i32
    %70 = tpu.memref_slice %arg5[%c7_i32_45, %c0_i32_46] : memref<8x32xf32, #tpu.memory_space<vmem>> -> memref<1x32xf32, #tpu.memory_space<vmem>>
    %71 = tpu.memref_slice %arg6[%c7_i32_43] : memref<8x!tpu.dma_semaphore, #tpu.memory_space<semaphore_mem>> -> memref<1x!tpu.dma_semaphore, #tpu.memory_space<semaphore_mem>>
    %72 = tpu.memref_squeeze %71 : memref<1x!tpu.dma_semaphore, #tpu.memory_space<semaphore_mem>> -> memref<!tpu.dma_semaphore, #tpu.memory_space<semaphore_mem>>
    tpu.enqueue_dma source(%69 : memref<1x32xf32, #tpu.memory_space<any>>) target(%70 : memref<1x32xf32, #tpu.memory_space<vmem>>) target_semaphore(%72 : memref<!tpu.dma_semaphore, #tpu.memory_space<semaphore_mem>>)
    %c0_i32_47 = arith.constant 0 : i32
    %c0_i32_48 = arith.constant 0 : i32
    %73 = tpu.memref_slice %arg2[%5, %c0_i32_48] : memref<64x32xf32, #tpu.memory_space<any>> -> memref<1x32xf32, #tpu.memory_space<any>>
    %c0_i32_49 = arith.constant 0 : i32
    %c0_i32_50 = arith.constant 0 : i32
    %74 = tpu.memref_slice %arg5[%c0_i32_49, %c0_i32_50] : memref<8x32xf32, #tpu.memory_space<vmem>> -> memref<1x32xf32, #tpu.memory_space<vmem>>
    %75 = tpu.memref_slice %arg6[%c0_i32_47] : memref<8x!tpu.dma_semaphore, #tpu.memory_space<semaphore_mem>> -> memref<1x!tpu.dma_semaphore, #tpu.memory_space<semaphore_mem>>
    %76 = tpu.memref_squeeze %75 : memref<1x!tpu.dma_semaphore, #tpu.memory_space<semaphore_mem>> -> memref<!tpu.dma_semaphore, #tpu.memory_space<semaphore_mem>>
    tpu.wait_dma2 semaphore(%76 : memref<!tpu.dma_semaphore, #tpu.memory_space<semaphore_mem>>) src(%73 : memref<1x32xf32, #tpu.memory_space<any>>) dst(%74 : memref<1x32xf32, #tpu.memory_space<vmem>>)
    %c1_i32_51 = arith.constant 1 : i32
    %c0_i32_52 = arith.constant 0 : i32
    %77 = tpu.memref_slice %arg2[%14, %c0_i32_52] : memref<64x32xf32, #tpu.memory_space<any>> -> memref<1x32xf32, #tpu.memory_space<any>>
    %c1_i32_53 = arith.constant 1 : i32
    %c0_i32_54 = arith.constant 0 : i32
    %78 = tpu.memref_slice %arg5[%c1_i32_53, %c0_i32_54] : memref<8x32xf32, #tpu.memory_space<vmem>> -> memref<1x32xf32, #tpu.memory_space<vmem>>
    %79 = tpu.memref_slice %arg6[%c1_i32_51] : memref<8x!tpu.dma_semaphore, #tpu.memory_space<semaphore_mem>> -> memref<1x!tpu.dma_semaphore, #tpu.memory_space<semaphore_mem>>
    %80 = tpu.memref_squeeze %79 : memref<1x!tpu.dma_semaphore, #tpu.memory_space<semaphore_mem>> -> memref<!tpu.dma_semaphore, #tpu.memory_space<semaphore_mem>>
    tpu.wait_dma2 semaphore(%80 : memref<!tpu.dma_semaphore, #tpu.memory_space<semaphore_mem>>) src(%77 : memref<1x32xf32, #tpu.memory_space<any>>) dst(%78 : memref<1x32xf32, #tpu.memory_space<vmem>>)
    %c2_i32_55 = arith.constant 2 : i32
    %c0_i32_56 = arith.constant 0 : i32
    %81 = tpu.memref_slice %arg2[%23, %c0_i32_56] : memref<64x32xf32, #tpu.memory_space<any>> -> memref<1x32xf32, #tpu.memory_space<any>>
    %c2_i32_57 = arith.constant 2 : i32
    %c0_i32_58 = arith.constant 0 : i32
    %82 = tpu.memref_slice %arg5[%c2_i32_57, %c0_i32_58] : memref<8x32xf32, #tpu.memory_space<vmem>> -> memref<1x32xf32, #tpu.memory_space<vmem>>
    %83 = tpu.memref_slice %arg6[%c2_i32_55] : memref<8x!tpu.dma_semaphore, #tpu.memory_space<semaphore_mem>> -> memref<1x!tpu.dma_semaphore, #tpu.memory_space<semaphore_mem>>
    %84 = tpu.memref_squeeze %83 : memref<1x!tpu.dma_semaphore, #tpu.memory_space<semaphore_mem>> -> memref<!tpu.dma_semaphore, #tpu.memory_space<semaphore_mem>>
    tpu.wait_dma2 semaphore(%84 : memref<!tpu.dma_semaphore, #tpu.memory_space<semaphore_mem>>) src(%81 : memref<1x32xf32, #tpu.memory_space<any>>) dst(%82 : memref<1x32xf32, #tpu.memory_space<vmem>>)
    %c3_i32_59 = arith.constant 3 : i32
    %c0_i32_60 = arith.constant 0 : i32
    %85 = tpu.memref_slice %arg2[%32, %c0_i32_60] : memref<64x32xf32, #tpu.memory_space<any>> -> memref<1x32xf32, #tpu.memory_space<any>>
    %c3_i32_61 = arith.constant 3 : i32
    %c0_i32_62 = arith.constant 0 : i32
    %86 = tpu.memref_slice %arg5[%c3_i32_61, %c0_i32_62] : memref<8x32xf32, #tpu.memory_space<vmem>> -> memref<1x32xf32, #tpu.memory_space<vmem>>
    %87 = tpu.memref_slice %arg6[%c3_i32_59] : memref<8x!tpu.dma_semaphore, #tpu.memory_space<semaphore_mem>> -> memref<1x!tpu.dma_semaphore, #tpu.memory_space<semaphore_mem>>
    %88 = tpu.memref_squeeze %87 : memref<1x!tpu.dma_semaphore, #tpu.memory_space<semaphore_mem>> -> memref<!tpu.dma_semaphore, #tpu.memory_space<semaphore_mem>>
    tpu.wait_dma2 semaphore(%88 : memref<!tpu.dma_semaphore, #tpu.memory_space<semaphore_mem>>) src(%85 : memref<1x32xf32, #tpu.memory_space<any>>) dst(%86 : memref<1x32xf32, #tpu.memory_space<vmem>>)
    %c4_i32_63 = arith.constant 4 : i32
    %c0_i32_64 = arith.constant 0 : i32
    %89 = tpu.memref_slice %arg2[%41, %c0_i32_64] : memref<64x32xf32, #tpu.memory_space<any>> -> memref<1x32xf32, #tpu.memory_space<any>>
    %c4_i32_65 = arith.constant 4 : i32
    %c0_i32_66 = arith.constant 0 : i32
    %90 = tpu.memref_slice %arg5[%c4_i32_65, %c0_i32_66] : memref<8x32xf32, #tpu.memory_space<vmem>> -> memref<1x32xf32, #tpu.memory_space<vmem>>
    %91 = tpu.memref_slice %arg6[%c4_i32_63] : memref<8x!tpu.dma_semaphore, #tpu.memory_space<semaphore_mem>> -> memref<1x!tpu.dma_semaphore, #tpu.memory_space<semaphore_mem>>
    %92 = tpu.memref_squeeze %91 : memref<1x!tpu.dma_semaphore, #tpu.memory_space<semaphore_mem>> -> memref<!tpu.dma_semaphore, #tpu.memory_space<semaphore_mem>>
    tpu.wait_dma2 semaphore(%92 : memref<!tpu.dma_semaphore, #tpu.memory_space<semaphore_mem>>) src(%89 : memref<1x32xf32, #tpu.memory_space<any>>) dst(%90 : memref<1x32xf32, #tpu.memory_space<vmem>>)
    %c5_i32_67 = arith.constant 5 : i32
    %c0_i32_68 = arith.constant 0 : i32
    %93 = tpu.memref_slice %arg2[%50, %c0_i32_68] : memref<64x32xf32, #tpu.memory_space<any>> -> memref<1x32xf32, #tpu.memory_space<any>>
    %c5_i32_69 = arith.constant 5 : i32
    %c0_i32_70 = arith.constant 0 : i32
    %94 = tpu.memref_slice %arg5[%c5_i32_69, %c0_i32_70] : memref<8x32xf32, #tpu.memory_space<vmem>> -> memref<1x32xf32, #tpu.memory_space<vmem>>
    %95 = tpu.memref_slice %arg6[%c5_i32_67] : memref<8x!tpu.dma_semaphore, #tpu.memory_space<semaphore_mem>> -> memref<1x!tpu.dma_semaphore, #tpu.memory_space<semaphore_mem>>
    %96 = tpu.memref_squeeze %95 : memref<1x!tpu.dma_semaphore, #tpu.memory_space<semaphore_mem>> -> memref<!tpu.dma_semaphore, #tpu.memory_space<semaphore_mem>>
    tpu.wait_dma2 semaphore(%96 : memref<!tpu.dma_semaphore, #tpu.memory_space<semaphore_mem>>) src(%93 : memref<1x32xf32, #tpu.memory_space<any>>) dst(%94 : memref<1x32xf32, #tpu.memory_space<vmem>>)
    %c6_i32_71 = arith.constant 6 : i32
    %c0_i32_72 = arith.constant 0 : i32
    %97 = tpu.memref_slice %arg2[%59, %c0_i32_72] : memref<64x32xf32, #tpu.memory_space<any>> -> memref<1x32xf32, #tpu.memory_space<any>>
    %c6_i32_73 = arith.constant 6 : i32
    %c0_i32_74 = arith.constant 0 : i32
    %98 = tpu.memref_slice %arg5[%c6_i32_73, %c0_i32_74] : memref<8x32xf32, #tpu.memory_space<vmem>> -> memref<1x32xf32, #tpu.memory_space<vmem>>
    %99 = tpu.memref_slice %arg6[%c6_i32_71] : memref<8x!tpu.dma_semaphore, #tpu.memory_space<semaphore_mem>> -> memref<1x!tpu.dma_semaphore, #tpu.memory_space<semaphore_mem>>
    %100 = tpu.memref_squeeze %99 : memref<1x!tpu.dma_semaphore, #tpu.memory_space<semaphore_mem>> -> memref<!tpu.dma_semaphore, #tpu.memory_space<semaphore_mem>>
    tpu.wait_dma2 semaphore(%100 : memref<!tpu.dma_semaphore, #tpu.memory_space<semaphore_mem>>) src(%97 : memref<1x32xf32, #tpu.memory_space<any>>) dst(%98 : memref<1x32xf32, #tpu.memory_space<vmem>>)
    %c7_i32_75 = arith.constant 7 : i32
    %c0_i32_76 = arith.constant 0 : i32
    %101 = tpu.memref_slice %arg2[%68, %c0_i32_76] : memref<64x32xf32, #tpu.memory_space<any>> -> memref<1x32xf32, #tpu.memory_space<any>>
    %c7_i32_77 = arith.constant 7 : i32
    %c0_i32_78 = arith.constant 0 : i32
    %102 = tpu.memref_slice %arg5[%c7_i32_77, %c0_i32_78] : memref<8x32xf32, #tpu.memory_space<vmem>> -> memref<1x32xf32, #tpu.memory_space<vmem>>
    %103 = tpu.memref_slice %arg6[%c7_i32_75] : memref<8x!tpu.dma_semaphore, #tpu.memory_space<semaphore_mem>> -> memref<1x!tpu.dma_semaphore, #tpu.memory_space<semaphore_mem>>
    %104 = tpu.memref_squeeze %103 : memref<1x!tpu.dma_semaphore, #tpu.memory_space<semaphore_mem>> -> memref<!tpu.dma_semaphore, #tpu.memory_space<semaphore_mem>>
    tpu.wait_dma2 semaphore(%104 : memref<!tpu.dma_semaphore, #tpu.memory_space<semaphore_mem>>) src(%101 : memref<1x32xf32, #tpu.memory_space<any>>) dst(%102 : memref<1x32xf32, #tpu.memory_space<vmem>>)
    %c0 = arith.constant 0 : index
    %c0_79 = arith.constant 0 : index
    %105 = vector.load %arg5[%c0, %c0_79] : memref<8x32xf32, #tpu.memory_space<vmem>>, vector<8x32xf32>
    %c0_80 = arith.constant 0 : index
    %c0_81 = arith.constant 0 : index
    %106 = vector.load %arg3[%c0_80, %c0_81] : memref<1x32xf32, #tpu.memory_space<vmem>>, vector<1x32xf32>
    %107 = vector.broadcast %106 : vector<1x32xf32> to vector<8x32xf32>
    %108 = arith.addf %105, %107 : vector<8x32xf32>
    %c0_82 = arith.constant 0 : index
    %c0_83 = arith.constant 0 : index
    %109 = vector.load %arg4[%c0_82, %c0_83] : memref<8x32xf32, #tpu.memory_space<vmem>>, vector<8x32xf32>
    tpu.vector_store %arg4[%c0_82, %c0_83], %108 {strides = array<i32>} : memref<8x32xf32, #tpu.memory_space<vmem>>, vector<8x32xf32>,
    return
  }
  func.func @transform_1(%arg0: i32, %arg1: memref<16xi32, #tpu.memory_space<smem>>) -> (i32, i32) {
    %c0_i32 = arith.constant 0 : i32
    %c0_i32_0 = arith.constant 0 : i32
    %c0_i32_1 = arith.constant 0 : i32
    return %c0_i32, %c0_i32_0 : i32, i32
  }
  func.func @transform_2(%arg0: i32, %arg1: memref<16xi32, #tpu.memory_space<smem>>) -> (i32, i32) {
    %c0_i32 = arith.constant 0 : i32
    %c0_i32_0 = arith.constant 0 : i32
    return %arg0, %c0_i32 : i32, i32
  }
}

</mosaic_0001>

<llo_original>
// kernel: tpu_custom_call.1
$region0: #{tpu_custom_call.1}
  #allocation0 [shape = 'u32[]', space=smem, size = 0x4, offset = 0x4, fixed_abs, tag = 'smem constant byte address 0x4 - core index']
  #allocation1 [shape = 'u32[144,128]{1,0:T(1,128)}', space=vmem, size = 0x12000, scoped, tag = 'internal scratch']
  #allocation2 [shape = 'f32[8,32]{1,0:T(8,128)}', space=vmem, size = 0x1000, scoped, tag = 'scratch operand']
  #allocation3 [shape = 's32[8]{0}', space=sflag, size = 0x20, scoped, tag = 'scratch operand']
  #allocation4 [shape = 's32[1]{0}', space=sflag, size = 0x4, scoped, tag = 'scoped memory for tpu_custom_call.1']
  #allocation5 [shape = 'u8[512]{0}', space=smem, size = 0x200, scoped, tag = 'prefetched SMEM operand 0']
  #allocation8 [shape = 's32[]', space=sflag, size = 0x4, offset = 0, fixed_abs, tag = 'sflag constant byte address 0x0 - dummy sync flag']
  #allocation9 [shape = 's32[]', space=sflag, size = 0x4, offset = 0, fixed_abs, tag = 'sflag constant byte address 0x0 - dummy sync flag']
  #allocation10 [shape = 's32[]', space=sflag, size = 0x4, offset = 0, fixed_abs, tag = 'sflag constant byte address 0x0 - dummy sync flag']
  #allocation11 [shape = 's32[]', space=sflag, size = 0x4, offset = 0, fixed_abs, tag = 'sflag constant byte address 0x0 - dummy sync flag']
  #allocation12 [shape = 's32[]', space=sflag, size = 0x4, offset = 0, fixed_abs, tag = 'sflag constant byte address 0x0 - dummy sync flag']
  #allocation13 [shape = 's32[]', space=sflag, size = 0x4, offset = 0, fixed_abs, tag = 'sflag constant byte address 0x0 - dummy sync flag']
  #allocation14 [shape = 's32[]', space=sflag, size = 0x4, offset = 0, fixed_abs, tag = 'sflag constant byte address 0x0 - dummy sync flag']
  #allocation15 [shape = 's32[]', space=sflag, size = 0x4, offset = 0, fixed_abs, tag = 'sflag constant byte address 0x0 - dummy sync flag']
  %s0 = inlined_call_operand.vmem [shape: s32[16], index: 0, kind: input, shape index: {}]
  %s1 = inlined_call_operand.vmem [shape: f32[64,32], index: 1, kind: input, shape index: {}]
  %s2 = inlined_call_operand.vmem [shape: f32[1,32], index: 2, kind: input, shape index: {}]
  %s3 = inlined_call_operand.hbm [shape: f32[16,32], index: 3, kind: output, shape index: {}]
  %s4 = sld [smem:[#allocation0]]
  $region277: #{tpu_custom_call.1} parent=0
    _
  %s6 = ssub.s32 1, %s4
  %s7 = scalar_select 0, %s6, %s4
  %s8 = sshll.u32 %s0, 4
  %s9 = int_to_ptr.vmem [resolvable:$true] %s8
  %11 = dma.vmem_to_smem %s9, 16, [#allocation5], [#allocation4]
  %12 = dma.done [#allocation4], 16
  %13 = sfence
  $region1: #{tpu_custom_call.1} parent=0
    #allocation6 [shape = 'u8[8192]{0}', space=vmem, size = 0x2000, scoped, tag = 'output window, operand 0']
    #allocation7 [shape = 's32[2]{0}', space=sflag, size = 0x8, scoped, tag = 'scoped memory for tpu_custom_call.1']
    %14 = vsyncpa [#allocation7], 0
    %s15 = scalar_lea.sflag [#allocation7], 1
    %16 = vsyncpa %s15, 0
    loop: start=0, step=1, limit=4
    $region2: #{tpu_custom_call.1} parent=1 // loop_pre_header
      _
    $region3: #{tpu_custom_call.1} parent=1 // loop_header
      %s18 = sphi 0, %s22
      %p19 = scmp.ge.s32.totalorder %s18, 4
      %s26 = sphi 0, %s26
      %s28 = sphi 0, %s26
      %s29 = sphi 0, %s28
      %s43 = sphi 0, %s29
      %s49 = sphi 0, %s51
      %s52 = sphi 0, %s49
      %s53 = sphi 0, %s52
      %s69 = sphi 0, %s53
    $region4: #{tpu_custom_call.1} parent=1 // loop_header_branch
      %21 = sbr.rel (%p19) target = $region8
    $region5: #{tpu_custom_call.1} parent=1 // loop_body
      %s23 = ssub.s32 %s18, 1
      %s24 = ssub.s32 %s18, 2
      %s25 = sadd.s32 %s18, 1
      %s27 = sadd.s32 %s26, 1
      %p30 = scmp.eq.s32.totalorder %s18, 1
      %p31 = scmp.ne.s32.totalorder %s26, %s28
      %p32 = scmp.eq.s32.totalorder %s18, 0
      %p33 = por %p31, %p32
      %p34 = scmp.ne.s32.totalorder %s26, %s28
      %p35 = scmp.eq.s32.totalorder %s23, 1
      %p36 = por %p34, %p35
      %p37 = scmp.ne.s32.totalorder %s28, %s29
      %p38 = scmp.eq.s32.totalorder %s23, 0
      %p39 = por %p37, %p38
      %p40 = scmp.ne.s32.totalorder %s28, %s29
      %p41 = scmp.eq.s32.totalorder %s24, 1
      %p42 = por %p40, %p41
      %p44 = scmp.ne.s32.totalorder %s29, %s43
      %p45 = scmp.eq.s32.totalorder %s24, 0
      %p46 = por %p44, %p45
      %s47 = ssub.s32 %s18, %s25
      %p48 = scmp.eq.s32.totalorder %s47, 0
      %s50 = sadd.s32 %s49, 1
      %s51 = scalar_select %p48, %s49, %s50
      %p54 = pneg %p48
      %p55 = scmp.eq.s32.totalorder %s18, 1
      %p56 = por %p54, %p55
      %p57 = scmp.ne.s32.totalorder %s49, %s52
      %p58 = scmp.eq.s32.totalorder %s18, 0
      %p59 = por %p57, %p58
      %p60 = scmp.ne.s32.totalorder %s49, %s52
      %p61 = scmp.eq.s32.totalorder %s23, 1
      %p62 = por %p60, %p61
      %p63 = scmp.ne.s32.totalorder %s52, %s53
      %p64 = scmp.eq.s32.totalorder %s23, 0
      %p65 = por %p63, %p64
      %p66 = scmp.ne.s32.totalorder %s52, %s53
      %p67 = scmp.eq.s32.totalorder %s24, 1
      %p68 = por %p66, %p67
      %p70 = scmp.ne.s32.totalorder %s53, %s69
      %p71 = scmp.eq.s32.totalorder %s24, 0
      %p72 = por %p70, %p71
      %p73 = scmp.le.s32.totalorder 1, %s18
      %p74 = scmp.lt.s32.totalorder %s18, 3
      %p75 = pnand %p73, %p74
      %p76 = pneg %p75
      // Predicated region
      $region9: #{tpu_custom_call.1} parent=5 // pred_check
        _
      $region10: #{tpu_custom_call.1} parent=5 // pred_check_branch
        %78 = sbr.rel (%p75) target = $region12
      $region11: #{tpu_custom_call.1} parent=5 // pred_region
        %s79 = ssub.s32 %s18, 1
        // Predicated region
        $region13: #{tpu_custom_call.1} parent=11 // pred_check
          %p80 = pneg %p39
        $region14: #{tpu_custom_call.1} parent=11 // pred_check_branch
          %82 = sbr.rel (%p80) target = $region16
        $region15: #{tpu_custom_call.1} parent=11 // pred_region
          _
        $region16: #{tpu_custom_call.1} parent=11 // pred_fallthru
          _
      $region12: #{tpu_custom_call.1} parent=5 // pred_fallthru
        _
      %p83 = scmp.lt.s32.totalorder %s18, 2
      // Predicated region
      $region17: #{tpu_custom_call.1} parent=5 // pred_check
        %p84 = pneg %p83
      $region18: #{tpu_custom_call.1} parent=5 // pred_check_branch
        %86 = sbr.rel (%p84) target = $region20
      $region19: #{tpu_custom_call.1} parent=5 // pred_region
        _
      $region20: #{tpu_custom_call.1} parent=5 // pred_fallthru
        _
      %p87 = scmp.le.s32.totalorder 1, %s18
      %p88 = scmp.lt.s32.totalorder %s18, 3
      %p89 = pnand %p87, %p88
      %p90 = pneg %p89
      // Predicated region
      $region21: #{tpu_custom_call.1} parent=5 // pred_check
        _
      $region22: #{tpu_custom_call.1} parent=5 // pred_check_branch
        %92 = sbr.rel (%p89) target = $region24
      $region23: #{tpu_custom_call.1} parent=5 // pred_region
        %s93 = ssub.s32 %s18, 1
        %p94 = pneg %p39
        %p95 = pneg %p36
        %p96 = pneg %p65
        %p97 = pneg %p62
        %s98 = sand.u32 %s52, 1
        %s99 = scalar_lea.sflag [#allocation7], %s98
        %s100 = sand.u32 %s52, 1
        %s101 = smul.addr %s100, 8
        %s102 = scalar_lea.vmem [#allocation6], %s101
        %s103 = smul.u32 %s23, 8
        %s104 = sld [smem:[#allocation5 + %s103]]
        %p105 = scmp.gt.s32.totalorder %s104, 0
        %s106 = scalar_select %p105, %s104, 0
        %p107 = scmp.lt.s32.totalorder %s106, 63
        %s108 = scalar_select %p107, %s106, 63
        %s109 = scalar_lea.vmem %s1, %s108
        %p111 = scmp.lt.u32.totalorder 1, 8
        %p112 = pneg %p111
        // Predicated region
        $region25: #{tpu_custom_call.1} parent=23 // pred_check
          _
        $region26: #{tpu_custom_call.1} parent=23 // pred_check_branch
          %114 = sbr.rel (%p111) target = $region28
        $region27: #{tpu_custom_call.1} parent=23 // pred_region
          %s129 = sand.u32 1, 7
          %p130 = scmp.eq.s32.totalorder %s129, 0
          %p131 = pneg %p130
          // Predicated region
          $region40: #{tpu_custom_call.1} parent=27 // pred_check
            _
          $region41: #{tpu_custom_call.1} parent=27 // pred_check_branch
            %133 = sbr.rel (%p130) target = $region43
          $region42: #{tpu_custom_call.1} parent=27 // pred_region
            %s134 = sand.u32 1, 7
            %s135 = ssub.s32 1, %s134
            %s136 = scalar_lea.vmem %s109, %s135
            %s137 = ssub.s32 1, %s134
            %s138 = scalar_lea.vmem [#allocation2], %s137
            %s139 = sshllo.u32 0, %s134
            loop: start=0, step=1, limit=1
            $region44: #{tpu_custom_call.1} parent=42 // loop_pre_header
              _
            $region45: #{tpu_custom_call.1} parent=42 // loop_header
              %s141 = sphi 0, %s145
              %p142 = scmp.ge.s32.totalorder %s141, 1
              %s146 = sphi %s136, %s136
              %s147 = sphi %s138, %s138
            $region46: #{tpu_custom_call.1} parent=42 // loop_header_branch
              %144 = sbr.rel (%p142) target = $region50
            $region47: #{tpu_custom_call.1} parent=42 // loop_body
              %v148 = vld [vmem:[%s146] sm:%s139]
              %149 = vst [vmem:[%s147] sm:%s139] %v148
            $region48: #{tpu_custom_call.1} parent=42 // loop_footer
              %s145 = sadd.s32 1, %s141
            $region49: #{tpu_custom_call.1} parent=42 // loop_footer_branch
              %140 = sbr.rel target = $region45
            $region50: #{tpu_custom_call.1} parent=42 // loop_exit
              _
          $region43: #{tpu_custom_call.1} parent=27 // pred_fallthru
            _
        $region28: #{tpu_custom_call.1} parent=23 // pred_fallthru
          _
        // Predicated region
        $region29: #{tpu_custom_call.1} parent=23 // pred_check
          %p115 = pneg %p111
        $region30: #{tpu_custom_call.1} parent=23 // pred_check_branch
          %117 = sbr.rel (%p115) target = $region32
        $region31: #{tpu_custom_call.1} parent=23 // pred_region
          %s118 = sshllo.u32 0, 1
          loop: start=0, step=1, limit=1
          $region33: #{tpu_custom_call.1} parent=31 // loop_pre_header
            _
          $region34: #{tpu_custom_call.1} parent=31 // loop_header
            %s120 = sphi 0, %s124
            %p121 = scmp.ge.s32.totalorder %s120, 1
            %s125 = sphi %s109, %s109
            %s126 = sphi [#allocation2], [#allocation2]
          $region35: #{tpu_custom_call.1} parent=31 // loop_header_branch
            %123 = sbr.rel (%p121) target = $region39
          $region36: #{tpu_custom_call.1} parent=31 // loop_body
            %v127 = vld [vmem:[%s125] sm:%s118]
            %128 = vst [vmem:[%s126] sm:%s118] %v127
          $region37: #{tpu_custom_call.1} parent=31 // loop_footer
            %s124 = sadd.s32 1, %s120
          $region38: #{tpu_custom_call.1} parent=31 // loop_footer_branch
            %119 = sbr.rel target = $region34
          $region39: #{tpu_custom_call.1} parent=31 // loop_exit
            _
        $region32: #{tpu_custom_call.1} parent=23 // pred_fallthru
          _
        // Predicated region
        $region51: #{tpu_custom_call.1} parent=23 // pred_check
          _
        $region52: #{tpu_custom_call.1} parent=23 // pred_check_branch
          %152 = sbr.rel (0) target = $region54
        $region53: #{tpu_custom_call.1} parent=23 // pred_region
          %153 = vsyncadd [#allocation3], 16
        $region54: #{tpu_custom_call.1} parent=23 // pred_fallthru
          _
        %s154 = sadd.s32 %s103, 1
        %s155 = sld [smem:[#allocation5 + %s154]]
        %p156 = scmp.gt.s32.totalorder %s155, 0
        %s157 = scalar_select %p156, %s155, 0
        %p158 = scmp.lt.s32.totalorder %s157, 63
        %s159 = scalar_select %p158, %s157, 63
        %s160 = scalar_lea.vmem %s1, %s159
        %s161 = scalar_lea.vmem [#allocation2], 1
        %s162 = scalar_lea.sflag [#allocation3], 1
        %p164 = scmp.lt.u32.totalorder 1, 8
        %p165 = pneg %p164
        // Predicated region
        $region55: #{tpu_custom_call.1} parent=23 // pred_check
          _
        $region56: #{tpu_custom_call.1} parent=23 // pred_check_branch
          %167 = sbr.rel (%p164) target = $region58
        $region57: #{tpu_custom_call.1} parent=23 // pred_region
          %s182 = sand.u32 1, 7
          %p183 = scmp.eq.s32.totalorder %s182, 0
          %p184 = pneg %p183
          // Predicated region
          $region70: #{tpu_custom_call.1} parent=57 // pred_check
            _
          $region71: #{tpu_custom_call.1} parent=57 // pred_check_branch
            %186 = sbr.rel (%p183) target = $region73
          $region72: #{tpu_custom_call.1} parent=57 // pred_region
            %s187 = sand.u32 1, 7
            %s188 = ssub.s32 1, %s187
            %s189 = scalar_lea.vmem %s160, %s188
            %s190 = ssub.s32 1, %s187
            %s191 = scalar_lea.vmem %s161, %s190 [#allocation2]
            %s192 = sshllo.u32 0, %s187
            loop: start=0, step=1, limit=1
            $region74: #{tpu_custom_call.1} parent=72 // loop_pre_header
              _
            $region75: #{tpu_custom_call.1} parent=72 // loop_header
              %s194 = sphi 0, %s198
              %p195 = scmp.ge.s32.totalorder %s194, 1
              %s199 = sphi %s189, %s189
              %s200 = sphi %s191, %s191
            $region76: #{tpu_custom_call.1} parent=72 // loop_header_branch
              %197 = sbr.rel (%p195) target = $region80
            $region77: #{tpu_custom_call.1} parent=72 // loop_body
              %v201 = vld [vmem:[%s199] sm:%s192]
              %202 = vst [vmem:[%s200] sm:%s192] %v201
            $region78: #{tpu_custom_call.1} parent=72 // loop_footer
              %s198 = sadd.s32 1, %s194
            $region79: #{tpu_custom_call.1} parent=72 // loop_footer_branch
              %193 = sbr.rel target = $region75
            $region80: #{tpu_custom_call.1} parent=72 // loop_exit
              _
          $region73: #{tpu_custom_call.1} parent=57 // pred_fallthru
            _
        $region58: #{tpu_custom_call.1} parent=23 // pred_fallthru
          _
        // Predicated region
        $region59: #{tpu_custom_call.1} parent=23 // pred_check
          %p168 = pneg %p164
        $region60: #{tpu_custom_call.1} parent=23 // pred_check_branch
          %170 = sbr.rel (%p168) target = $region62
        $region61: #{tpu_custom_call.1} parent=23 // pred_region
          %s171 = sshllo.u32 0, 1
          loop: start=0, step=1, limit=1
          $region63: #{tpu_custom_call.1} parent=61 // loop_pre_header
            _
          $region64: #{tpu_custom_call.1} parent=61 // loop_header
            %s173 = sphi 0, %s177
            %p174 = scmp.ge.s32.totalorder %s173, 1
            %s178 = sphi %s160, %s160
            %s179 = sphi %s161, %s161
          $region65: #{tpu_custom_call.1} parent=61 // loop_header_branch
            %176 = sbr.rel (%p174) target = $region69
          $region66: #{tpu_custom_call.1} parent=61 // loop_body
            %v180 = vld [vmem:[%s178] sm:%s171]
            %181 = vst [vmem:[%s179] sm:%s171] %v180
          $region67: #{tpu_custom_call.1} parent=61 // loop_footer
            %s177 = sadd.s32 1, %s173
          $region68: #{tpu_custom_call.1} parent=61 // loop_footer_branch
            %172 = sbr.rel target = $region64
          $region69: #{tpu_custom_call.1} parent=61 // loop_exit
            _
        $region62: #{tpu_custom_call.1} parent=23 // pred_fallthru
          _
        // Predicated region
        $region81: #{tpu_custom_call.1} parent=23 // pred_check
          _
        $region82: #{tpu_custom_call.1} parent=23 // pred_check_branch
          %205 = sbr.rel (0) target = $region84
        $region83: #{tpu_custom_call.1} parent=23 // pred_region
          %206 = vsyncadd %s162, 16
        $region84: #{tpu_custom_call.1} parent=23 // pred_fallthru
          _
        %s207 = sadd.s32 %s103, 2
        %s208 = sld [smem:[#allocation5 + %s207]]
        %p209 = scmp.gt.s32.totalorder %s208, 0
        %s210 = scalar_select %p209, %s208, 0
        %p211 = scmp.lt.s32.totalorder %s210, 63
        %s212 = scalar_select %p211, %s210, 63
        %s213 = scalar_lea.vmem %s1, %s212
        %s214 = scalar_lea.vmem [#allocation2], 2
        %s215 = scalar_lea.sflag [#allocation3], 2
        %p217 = scmp.lt.u32.totalorder 1, 8
        %p218 = pneg %p217
        // Predicated region
        $region85: #{tpu_custom_call.1} parent=23 // pred_check
          _
        $region86: #{tpu_custom_call.1} parent=23 // pred_check_branch
          %220 = sbr.rel (%p217) target = $region88
        $region87: #{tpu_custom_call.1} parent=23 // pred_region
          %s235 = sand.u32 1, 7
          %p236 = scmp.eq.s32.totalorder %s235, 0
          %p237 = pneg %p236
          // Predicated region
          $region100: #{tpu_custom_call.1} parent=87 // pred_check
            _
          $region101: #{tpu_custom_call.1} parent=87 // pred_check_branch
            %239 = sbr.rel (%p236) target = $region103
          $region102: #{tpu_custom_call.1} parent=87 // pred_region
            %s240 = sand.u32 1, 7
            %s241 = ssub.s32 1, %s240
            %s242 = scalar_lea.vmem %s213, %s241
            %s243 = ssub.s32 1, %s240
            %s244 = scalar_lea.vmem %s214, %s243 [#allocation2]
            %s245 = sshllo.u32 0, %s240
            loop: start=0, step=1, limit=1
            $region104: #{tpu_custom_call.1} parent=102 // loop_pre_header
              _
            $region105: #{tpu_custom_call.1} parent=102 // loop_header
              %s247 = sphi 0, %s251
              %p248 = scmp.ge.s32.totalorder %s247, 1
              %s252 = sphi %s242, %s242
              %s253 = sphi %s244, %s244
            $region106: #{tpu_custom_call.1} parent=102 // loop_header_branch
              %250 = sbr.rel (%p248) target = $region110
            $region107: #{tpu_custom_call.1} parent=102 // loop_body
              %v254 = vld [vmem:[%s252] sm:%s245]
              %255 = vst [vmem:[%s253] sm:%s245] %v254
            $region108: #{tpu_custom_call.1} parent=102 // loop_footer
              %s251 = sadd.s32 1, %s247
            $region109: #{tpu_custom_call.1} parent=102 // loop_footer_branch
              %246 = sbr.rel target = $region105
            $region110: #{tpu_custom_call.1} parent=102 // loop_exit
              _
          $region103: #{tpu_custom_call.1} parent=87 // pred_fallthru
            _
        $region88: #{tpu_custom_call.1} parent=23 // pred_fallthru
          _
        // Predicated region
        $region89: #{tpu_custom_call.1} parent=23 // pred_check
          %p221 = pneg %p217
        $region90: #{tpu_custom_call.1} parent=23 // pred_check_branch
          %223 = sbr.rel (%p221) target = $region92
        $region91: #{tpu_custom_call.1} parent=23 // pred_region
          %s224 = sshllo.u32 0, 1
          loop: start=0, step=1, limit=1
          $region93: #{tpu_custom_call.1} parent=91 // loop_pre_header
            _
          $region94: #{tpu_custom_call.1} parent=91 // loop_header
            %s226 = sphi 0, %s230
            %p227 = scmp.ge.s32.totalorder %s226, 1
            %s231 = sphi %s213, %s213
            %s232 = sphi %s214, %s214
          $region95: #{tpu_custom_call.1} parent=91 // loop_header_branch
            %229 = sbr.rel (%p227) target = $region99
          $region96: #{tpu_custom_call.1} parent=91 // loop_body
            %v233 = vld [vmem:[%s231] sm:%s224]
            %234 = vst [vmem:[%s232] sm:%s224] %v233
          $region97: #{tpu_custom_call.1} parent=91 // loop_footer
            %s230 = sadd.s32 1, %s226
          $region98: #{tpu_custom_call.1} parent=91 // loop_footer_branch
            %225 = sbr.rel target = $region94
          $region99: #{tpu_custom_call.1} parent=91 // loop_exit
            _
        $region92: #{tpu_custom_call.1} parent=23 // pred_fallthru
          _
        // Predicated region
        $region111: #{tpu_custom_call.1} parent=23 // pred_check
          _
        $region112: #{tpu_custom_call.1} parent=23 // pred_check_branch
          %258 = sbr.rel (0) target = $region114
        $region113: #{tpu_custom_call.1} parent=23 // pred_region
          %259 = vsyncadd %s215, 16
        $region114: #{tpu_custom_call.1} parent=23 // pred_fallthru
          _
        %s260 = sadd.s32 %s103, 3
        %s261 = sld [smem:[#allocation5 + %s260]]
        %p262 = scmp.gt.s32.totalorder %s261, 0
        %s263 = scalar_select %p262, %s261, 0
        %p264 = scmp.lt.s32.totalorder %s263, 63
        %s265 = scalar_select %p264, %s263, 63
        %s266 = scalar_lea.vmem %s1, %s265
        %s267 = scalar_lea.vmem [#allocation2], 3
        %s268 = scalar_lea.sflag [#allocation3], 3
        %p270 = scmp.lt.u32.totalorder 1, 8
        %p271 = pneg %p270
        // Predicated region
        $region115: #{tpu_custom_call.1} parent=23 // pred_check
          _
        $region116: #{tpu_custom_call.1} parent=23 // pred_check_branch
          %273 = sbr.rel (%p270) target = $region118
        $region117: #{tpu_custom_call.1} parent=23 // pred_region
          %s288 = sand.u32 1, 7
          %p289 = scmp.eq.s32.totalorder %s288, 0
          %p290 = pneg %p289
          // Predicated region
          $region130: #{tpu_custom_call.1} parent=117 // pred_check
            _
          $region131: #{tpu_custom_call.1} parent=117 // pred_check_branch
            %292 = sbr.rel (%p289) target = $region133
          $region132: #{tpu_custom_call.1} parent=117 // pred_region
            %s293 = sand.u32 1, 7
            %s294 = ssub.s32 1, %s293
            %s295 = scalar_lea.vmem %s266, %s294
            %s296 = ssub.s32 1, %s293
            %s297 = scalar_lea.vmem %s267, %s296 [#allocation2]
            %s298 = sshllo.u32 0, %s293
            loop: start=0, step=1, limit=1
            $region134: #{tpu_custom_call.1} parent=132 // loop_pre_header
              _
            $region135: #{tpu_custom_call.1} parent=132 // loop_header
              %s300 = sphi 0, %s304
              %p301 = scmp.ge.s32.totalorder %s300, 1
              %s305 = sphi %s295, %s295
              %s306 = sphi %s297, %s297
            $region136: #{tpu_custom_call.1} parent=132 // loop_header_branch
              %303 = sbr.rel (%p301) target = $region140
            $region137: #{tpu_custom_call.1} parent=132 // loop_body
              %v307 = vld [vmem:[%s305] sm:%s298]
              %308 = vst [vmem:[%s306] sm:%s298] %v307
            $region138: #{tpu_custom_call.1} parent=132 // loop_footer
              %s304 = sadd.s32 1, %s300
            $region139: #{tpu_custom_call.1} parent=132 // loop_footer_branch
              %299 = sbr.rel target = $region135
            $region140: #{tpu_custom_call.1} parent=132 // loop_exit
              _
          $region133: #{tpu_custom_call.1} parent=117 // pred_fallthru
            _
        $region118: #{tpu_custom_call.1} parent=23 // pred_fallthru
          _
        // Predicated region
        $region119: #{tpu_custom_call.1} parent=23 // pred_check
          %p274 = pneg %p270
        $region120: #{tpu_custom_call.1} parent=23 // pred_check_branch
          %276 = sbr.rel (%p274) target = $region122
        $region121: #{tpu_custom_call.1} parent=23 // pred_region
          %s277 = sshllo.u32 0, 1
          loop: start=0, step=1, limit=1
          $region123: #{tpu_custom_call.1} parent=121 // loop_pre_header
            _
          $region124: #{tpu_custom_call.1} parent=121 // loop_header
            %s279 = sphi 0, %s283
            %p280 = scmp.ge.s32.totalorder %s279, 1
            %s284 = sphi %s266, %s266
            %s285 = sphi %s267, %s267
          $region125: #{tpu_custom_call.1} parent=121 // loop_header_branch
            %282 = sbr.rel (%p280) target = $region129
          $region126: #{tpu_custom_call.1} parent=121 // loop_body
            %v286 = vld [vmem:[%s284] sm:%s277]
            %287 = vst [vmem:[%s285] sm:%s277] %v286
          $region127: #{tpu_custom_call.1} parent=121 // loop_footer
            %s283 = sadd.s32 1, %s279
          $region128: #{tpu_custom_call.1} parent=121 // loop_footer_branch
            %278 = sbr.rel target = $region124
          $region129: #{tpu_custom_call.1} parent=121 // loop_exit
            _
        $region122: #{tpu_custom_call.1} parent=23 // pred_fallthru
          _
        // Predicated region
        $region141: #{tpu_custom_call.1} parent=23 // pred_check
          _
        $region142: #{tpu_custom_call.1} parent=23 // pred_check_branch
          %311 = sbr.rel (0) target = $region144
        $region143: #{tpu_custom_call.1} parent=23 // pred_region
          %312 = vsyncadd %s268, 16
        $region144: #{tpu_custom_call.1} parent=23 // pred_fallthru
          _
        %s313 = sadd.s32 %s103, 4
        %s314 = sld [smem:[#allocation5 + %s313]]
        %p315 = scmp.gt.s32.totalorder %s314, 0
        %s316 = scalar_select %p315, %s314, 0
        %p317 = scmp.lt.s32.totalorder %s316, 63
        %s318 = scalar_select %p317, %s316, 63
        %s319 = scalar_lea.vmem %s1, %s318
        %s320 = scalar_lea.vmem [#allocation2], 4
        %s321 = scalar_lea.sflag [#allocation3], 4
        %p323 = scmp.lt.u32.totalorder 1, 8
        %p324 = pneg %p323
        // Predicated region
        $region145: #{tpu_custom_call.1} parent=23 // pred_check
          _
        $region146: #{tpu_custom_call.1} parent=23 // pred_check_branch
          %326 = sbr.rel (%p323) target = $region148
        $region147: #{tpu_custom_call.1} parent=23 // pred_region
          %s341 = sand.u32 1, 7
          %p342 = scmp.eq.s32.totalorder %s341, 0
          %p343 = pneg %p342
          // Predicated region
          $region160: #{tpu_custom_call.1} parent=147 // pred_check
            _
          $region161: #{tpu_custom_call.1} parent=147 // pred_check_branch
            %345 = sbr.rel (%p342) target = $region163
          $region162: #{tpu_custom_call.1} parent=147 // pred_region
            %s346 = sand.u32 1, 7
            %s347 = ssub.s32 1, %s346
            %s348 = scalar_lea.vmem %s319, %s347
            %s349 = ssub.s32 1, %s346
            %s350 = scalar_lea.vmem %s320, %s349 [#allocation2]
            %s351 = sshllo.u32 0, %s346
            loop: start=0, step=1, limit=1
            $region164: #{tpu_custom_call.1} parent=162 // loop_pre_header
              _
            $region165: #{tpu_custom_call.1} parent=162 // loop_header
              %s353 = sphi 0, %s357
              %p354 = scmp.ge.s32.totalorder %s353, 1
              %s358 = sphi %s348, %s348
              %s359 = sphi %s350, %s350
            $region166: #{tpu_custom_call.1} parent=162 // loop_header_branch
              %356 = sbr.rel (%p354) target = $region170
            $region167: #{tpu_custom_call.1} parent=162 // loop_body
              %v360 = vld [vmem:[%s358] sm:%s351]
              %361 = vst [vmem:[%s359] sm:%s351] %v360
            $region168: #{tpu_custom_call.1} parent=162 // loop_footer
              %s357 = sadd.s32 1, %s353
            $region169: #{tpu_custom_call.1} parent=162 // loop_footer_branch
              %352 = sbr.rel target = $region165
            $region170: #{tpu_custom_call.1} parent=162 // loop_exit
              _
          $region163: #{tpu_custom_call.1} parent=147 // pred_fallthru
            _
        $region148: #{tpu_custom_call.1} parent=23 // pred_fallthru
          _
        // Predicated region
        $region149: #{tpu_custom_call.1} parent=23 // pred_check
          %p327 = pneg %p323
        $region150: #{tpu_custom_call.1} parent=23 // pred_check_branch
          %329 = sbr.rel (%p327) target = $region152
        $region151: #{tpu_custom_call.1} parent=23 // pred_region
          %s330 = sshllo.u32 0, 1
          loop: start=0, step=1, limit=1
          $region153: #{tpu_custom_call.1} parent=151 // loop_pre_header
            _
          $region154: #{tpu_custom_call.1} parent=151 // loop_header
            %s332 = sphi 0, %s336
            %p333 = scmp.ge.s32.totalorder %s332, 1
            %s337 = sphi %s319, %s319
            %s338 = sphi %s320, %s320
          $region155: #{tpu_custom_call.1} parent=151 // loop_header_branch
            %335 = sbr.rel (%p333) target = $region159
          $region156: #{tpu_custom_call.1} parent=151 // loop_body
            %v339 = vld [vmem:[%s337] sm:%s330]
            %340 = vst [vmem:[%s338] sm:%s330] %v339
          $region157: #{tpu_custom_call.1} parent=151 // loop_footer
            %s336 = sadd.s32 1, %s332
          $region158: #{tpu_custom_call.1} parent=151 // loop_footer_branch
            %331 = sbr.rel target = $region154
          $region159: #{tpu_custom_call.1} parent=151 // loop_exit
            _
        $region152: #{tpu_custom_call.1} parent=23 // pred_fallthru
          _
        // Predicated region
        $region171: #{tpu_custom_call.1} parent=23 // pred_check
          _
        $region172: #{tpu_custom_call.1} parent=23 // pred_check_branch
          %364 = sbr.rel (0) target = $region174
        $region173: #{tpu_custom_call.1} parent=23 // pred_region
          %365 = vsyncadd %s321, 16
        $region174: #{tpu_custom_call.1} parent=23 // pred_fallthru
          _
        %s366 = sadd.s32 %s103, 5
        %s367 = sld [smem:[#allocation5 + %s366]]
        %p368 = scmp.gt.s32.totalorder %s367, 0
        %s369 = scalar_select %p368, %s367, 0
        %p370 = scmp.lt.s32.totalorder %s369, 63
        %s371 = scalar_select %p370, %s369, 63
        %s372 = scalar_lea.vmem %s1, %s371
        %s373 = scalar_lea.vmem [#allocation2], 5
        %s374 = scalar_lea.sflag [#allocation3], 5
        %p376 = scmp.lt.u32.totalorder 1, 8
        %p377 = pneg %p376
        // Predicated region
        $region175: #{tpu_custom_call.1} parent=23 // pred_check
          _
        $region176: #{tpu_custom_call.1} parent=23 // pred_check_branch
          %379 = sbr.rel (%p376) target = $region178
        $region177: #{tpu_custom_call.1} parent=23 // pred_region
          %s394 = sand.u32 1, 7
          %p395 = scmp.eq.s32.totalorder %s394, 0
          %p396 = pneg %p395
          // Predicated region
          $region190: #{tpu_custom_call.1} parent=177 // pred_check
            _
          $region191: #{tpu_custom_call.1} parent=177 // pred_check_branch
            %398 = sbr.rel (%p395) target = $region193
          $region192: #{tpu_custom_call.1} parent=177 // pred_region
            %s399 = sand.u32 1, 7
            %s400 = ssub.s32 1, %s399
            %s401 = scalar_lea.vmem %s372, %s400
            %s402 = ssub.s32 1, %s399
            %s403 = scalar_lea.vmem %s373, %s402 [#allocation2]
            %s404 = sshllo.u32 0, %s399
            loop: start=0, step=1, limit=1
            $region194: #{tpu_custom_call.1} parent=192 // loop_pre_header
              _
            $region195: #{tpu_custom_call.1} parent=192 // loop_header
              %s406 = sphi 0, %s410
              %p407 = scmp.ge.s32.totalorder %s406, 1
              %s411 = sphi %s401, %s401
              %s412 = sphi %s403, %s403
            $region196: #{tpu_custom_call.1} parent=192 // loop_header_branch
              %409 = sbr.rel (%p407) target = $region200
            $region197: #{tpu_custom_call.1} parent=192 // loop_body
              %v413 = vld [vmem:[%s411] sm:%s404]
              %414 = vst [vmem:[%s412] sm:%s404] %v413
            $region198: #{tpu_custom_call.1} parent=192 // loop_footer
              %s410 = sadd.s32 1, %s406
            $region199: #{tpu_custom_call.1} parent=192 // loop_footer_branch
              %405 = sbr.rel target = $region195
            $region200: #{tpu_custom_call.1} parent=192 // loop_exit
              _
          $region193: #{tpu_custom_call.1} parent=177 // pred_fallthru
            _
        $region178: #{tpu_custom_call.1} parent=23 // pred_fallthru
          _
        // Predicated region
        $region179: #{tpu_custom_call.1} parent=23 // pred_check
          %p380 = pneg %p376
        $region180: #{tpu_custom_call.1} parent=23 // pred_check_branch
          %382 = sbr.rel (%p380) target = $region182
        $region181: #{tpu_custom_call.1} parent=23 // pred_region
          %s383 = sshllo.u32 0, 1
          loop: start=0, step=1, limit=1
          $region183: #{tpu_custom_call.1} parent=181 // loop_pre_header
            _
          $region184: #{tpu_custom_call.1} parent=181 // loop_header
            %s385 = sphi 0, %s389
            %p386 = scmp.ge.s32.totalorder %s385, 1
            %s390 = sphi %s372, %s372
            %s391 = sphi %s373, %s373
          $region185: #{tpu_custom_call.1} parent=181 // loop_header_branch
            %388 = sbr.rel (%p386) target = $region189
          $region186: #{tpu_custom_call.1} parent=181 // loop_body
            %v392 = vld [vmem:[%s390] sm:%s383]
            %393 = vst [vmem:[%s391] sm:%s383] %v392
          $region187: #{tpu_custom_call.1} parent=181 // loop_footer
            %s389 = sadd.s32 1, %s385
          $region188: #{tpu_custom_call.1} parent=181 // loop_footer_branch
            %384 = sbr.rel target = $region184
          $region189: #{tpu_custom_call.1} parent=181 // loop_exit
            _
        $region182: #{tpu_custom_call.1} parent=23 // pred_fallthru
          _
        // Predicated region
        $region201: #{tpu_custom_call.1} parent=23 // pred_check
          _
        $region202: #{tpu_custom_call.1} parent=23 // pred_check_branch
          %417 = sbr.rel (0) target = $region204
        $region203: #{tpu_custom_call.1} parent=23 // pred_region
          %418 = vsyncadd %s374, 16
        $region204: #{tpu_custom_call.1} parent=23 // pred_fallthru
          _
        %s419 = sadd.s32 %s103, 6
        %s420 = sld [smem:[#allocation5 + %s419]]
        %p421 = scmp.gt.s32.totalorder %s420, 0
        %s422 = scalar_select %p421, %s420, 0
        %p423 = scmp.lt.s32.totalorder %s422, 63
        %s424 = scalar_select %p423, %s422, 63
        %s425 = scalar_lea.vmem %s1, %s424
        %s426 = scalar_lea.vmem [#allocation2], 6
        %s427 = scalar_lea.sflag [#allocation3], 6
        %p429 = scmp.lt.u32.totalorder 1, 8
        %p430 = pneg %p429
        // Predicated region
        $region205: #{tpu_custom_call.1} parent=23 // pred_check
          _
        $region206: #{tpu_custom_call.1} parent=23 // pred_check_branch
          %432 = sbr.rel (%p429) target = $region208
        $region207: #{tpu_custom_call.1} parent=23 // pred_region
          %s447 = sand.u32 1, 7
          %p448 = scmp.eq.s32.totalorder %s447, 0
          %p449 = pneg %p448
          // Predicated region
          $region220: #{tpu_custom_call.1} parent=207 // pred_check
            _
          $region221: #{tpu_custom_call.1} parent=207 // pred_check_branch
            %451 = sbr.rel (%p448) target = $region223
          $region222: #{tpu_custom_call.1} parent=207 // pred_region
            %s452 = sand.u32 1, 7
            %s453 = ssub.s32 1, %s452
            %s454 = scalar_lea.vmem %s425, %s453
            %s455 = ssub.s32 1, %s452
            %s456 = scalar_lea.vmem %s426, %s455 [#allocation2]
            %s457 = sshllo.u32 0, %s452
            loop: start=0, step=1, limit=1
            $region224: #{tpu_custom_call.1} parent=222 // loop_pre_header
              _
            $region225: #{tpu_custom_call.1} parent=222 // loop_header
              %s459 = sphi 0, %s463
              %p460 = scmp.ge.s32.totalorder %s459, 1
              %s464 = sphi %s454, %s454
              %s465 = sphi %s456, %s456
            $region226: #{tpu_custom_call.1} parent=222 // loop_header_branch
              %462 = sbr.rel (%p460) target = $region230
            $region227: #{tpu_custom_call.1} parent=222 // loop_body
              %v466 = vld [vmem:[%s464] sm:%s457]
              %467 = vst [vmem:[%s465] sm:%s457] %v466
            $region228: #{tpu_custom_call.1} parent=222 // loop_footer
              %s463 = sadd.s32 1, %s459
            $region229: #{tpu_custom_call.1} parent=222 // loop_footer_branch
              %458 = sbr.rel target = $region225
            $region230: #{tpu_custom_call.1} parent=222 // loop_exit
              _
          $region223: #{tpu_custom_call.1} parent=207 // pred_fallthru
            _
        $region208: #{tpu_custom_call.1} parent=23 // pred_fallthru
          _
        // Predicated region
        $region209: #{tpu_custom_call.1} parent=23 // pred_check
          %p433 = pneg %p429
        $region210: #{tpu_custom_call.1} parent=23 // pred_check_branch
          %435 = sbr.rel (%p433) target = $region212
        $region211: #{tpu_custom_call.1} parent=23 // pred_region
          %s436 = sshllo.u32 0, 1
          loop: start=0, step=1, limit=1
          $region213: #{tpu_custom_call.1} parent=211 // loop_pre_header
            _
          $region214: #{tpu_custom_call.1} parent=211 // loop_header
            %s438 = sphi 0, %s442
            %p439 = scmp.ge.s32.totalorder %s438, 1
            %s443 = sphi %s425, %s425
            %s444 = sphi %s426, %s426
          $region215: #{tpu_custom_call.1} parent=211 // loop_header_branch
            %441 = sbr.rel (%p439) target = $region219
          $region216: #{tpu_custom_call.1} parent=211 // loop_body
            %v445 = vld [vmem:[%s443] sm:%s436]
            %446 = vst [vmem:[%s444] sm:%s436] %v445
          $region217: #{tpu_custom_call.1} parent=211 // loop_footer
            %s442 = sadd.s32 1, %s438
          $region218: #{tpu_custom_call.1} parent=211 // loop_footer_branch
            %437 = sbr.rel target = $region214
          $region219: #{tpu_custom_call.1} parent=211 // loop_exit
            _
        $region212: #{tpu_custom_call.1} parent=23 // pred_fallthru
          _
        // Predicated region
        $region231: #{tpu_custom_call.1} parent=23 // pred_check
          _
        $region232: #{tpu_custom_call.1} parent=23 // pred_check_branch
          %470 = sbr.rel (0) target = $region234
        $region233: #{tpu_custom_call.1} parent=23 // pred_region
          %471 = vsyncadd %s427, 16
        $region234: #{tpu_custom_call.1} parent=23 // pred_fallthru
          _
        %s472 = sadd.s32 %s103, 7
        %s473 = sld [smem:[#allocation5 + %s472]]
        %p474 = scmp.gt.s32.totalorder %s473, 0
        %s475 = scalar_select %p474, %s473, 0
        %p476 = scmp.lt.s32.totalorder %s475, 63
        %s477 = scalar_select %p476, %s475, 63
        %s478 = scalar_lea.vmem %s1, %s477
        %s479 = scalar_lea.vmem [#allocation2], 7
        %s480 = scalar_lea.sflag [#allocation3], 7
        %p482 = scmp.lt.u32.totalorder 1, 8
        %p483 = pneg %p482
        // Predicated region
        $region235: #{tpu_custom_call.1} parent=23 // pred_check
          _
        $region236: #{tpu_custom_call.1} parent=23 // pred_check_branch
          %485 = sbr.rel (%p482) target = $region238
        $region237: #{tpu_custom_call.1} parent=23 // pred_region
          %s500 = sand.u32 1, 7
          %p501 = scmp.eq.s32.totalorder %s500, 0
          %p502 = pneg %p501
          // Predicated region
          $region250: #{tpu_custom_call.1} parent=237 // pred_check
            _
          $region251: #{tpu_custom_call.1} parent=237 // pred_check_branch
            %504 = sbr.rel (%p501) target = $region253
          $region252: #{tpu_custom_call.1} parent=237 // pred_region
            %s505 = sand.u32 1, 7
            %s506 = ssub.s32 1, %s505
            %s507 = scalar_lea.vmem %s478, %s506
            %s508 = ssub.s32 1, %s505
            %s509 = scalar_lea.vmem %s479, %s508 [#allocation2]
            %s510 = sshllo.u32 0, %s505
            loop: start=0, step=1, limit=1
            $region254: #{tpu_custom_call.1} parent=252 // loop_pre_header
              _
            $region255: #{tpu_custom_call.1} parent=252 // loop_header
              %s512 = sphi 0, %s516
              %p513 = scmp.ge.s32.totalorder %s512, 1
              %s517 = sphi %s507, %s507
              %s518 = sphi %s509, %s509
            $region256: #{tpu_custom_call.1} parent=252 // loop_header_branch
              %515 = sbr.rel (%p513) target = $region260
            $region257: #{tpu_custom_call.1} parent=252 // loop_body
              %v519 = vld [vmem:[%s517] sm:%s510]
              %520 = vst [vmem:[%s518] sm:%s510] %v519
            $region258: #{tpu_custom_call.1} parent=252 // loop_footer
              %s516 = sadd.s32 1, %s512
            $region259: #{tpu_custom_call.1} parent=252 // loop_footer_branch
              %511 = sbr.rel target = $region255
            $region260: #{tpu_custom_call.1} parent=252 // loop_exit
              _
          $region253: #{tpu_custom_call.1} parent=237 // pred_fallthru
            _
        $region238: #{tpu_custom_call.1} parent=23 // pred_fallthru
          _
        // Predicated region
        $region239: #{tpu_custom_call.1} parent=23 // pred_check
          %p486 = pneg %p482
        $region240: #{tpu_custom_call.1} parent=23 // pred_check_branch
          %488 = sbr.rel (%p486) target = $region242
        $region241: #{tpu_custom_call.1} parent=23 // pred_region
          %s489 = sshllo.u32 0, 1
          loop: start=0, step=1, limit=1
          $region243: #{tpu_custom_call.1} parent=241 // loop_pre_header
            _
          $region244: #{tpu_custom_call.1} parent=241 // loop_header
            %s491 = sphi 0, %s495
            %p492 = scmp.ge.s32.totalorder %s491, 1
            %s496 = sphi %s478, %s478
            %s497 = sphi %s479, %s479
          $region245: #{tpu_custom_call.1} parent=241 // loop_header_branch
            %494 = sbr.rel (%p492) target = $region249
          $region246: #{tpu_custom_call.1} parent=241 // loop_body
            %v498 = vld [vmem:[%s496] sm:%s489]
            %499 = vst [vmem:[%s497] sm:%s489] %v498
          $region247: #{tpu_custom_call.1} parent=241 // loop_footer
            %s495 = sadd.s32 1, %s491
          $region248: #{tpu_custom_call.1} parent=241 // loop_footer_branch
            %490 = sbr.rel target = $region244
          $region249: #{tpu_custom_call.1} parent=241 // loop_exit
            _
        $region242: #{tpu_custom_call.1} parent=23 // pred_fallthru
          _
        // Predicated region
        $region261: #{tpu_custom_call.1} parent=23 // pred_check
          _
        $region262: #{tpu_custom_call.1} parent=23 // pred_check_branch
          %523 = sbr.rel (0) target = $region264
        $region263: #{tpu_custom_call.1} parent=23 // pred_region
          %524 = vsyncadd %s480, 16
        $region264: #{tpu_custom_call.1} parent=23 // pred_fallthru
          _
        %s525 = smul.u32 1, 1
        %s526 = sshll.u32 %s525, 4
        %527 = dma.done [#allocation3], %s526
        %s528 = sshll.u32 %s525, 4
        %529 = dma.done %s162, %s528
        %s530 = sshll.u32 %s525, 4
        %531 = dma.done %s215, %s530
        %s532 = sshll.u32 %s525, 4
        %533 = dma.done %s268, %s532
        %s534 = sshll.u32 %s525, 4
        %535 = dma.done %s321, %s534
        %s536 = sshll.u32 %s525, 4
        %537 = dma.done %s374, %s536
        %s538 = sshll.u32 %s525, 4
        %539 = dma.done %s427, %s538
        %s540 = sshll.u32 %s525, 4
        %541 = dma.done %s480, %s540
        %v542 = vld [vmem:[#allocation2] sm:$0xff]
        %v543 = vld [vmem:[%s2] sm:$0x1]
        %v545 = vlaneseq
        %v546 = vshrl.u32 %v545, 7
        %v547 = vsub.s32 0, %v546
        %v548 = vrot.slane %v543, %v547
        %v550 = vadd.f32 %v542, %v548
        %vm551 = vcmask 261120
        %552 = vst.msk [vmem:[%s102] sm:$0xff] %vm551, %v550
        %s553 = sand.u32 %s52, 1
        %s554 = scalar_lea.sflag [#allocation7], %s553
        %s555 = sand.u32 %s52, 1
        %s556 = smul.addr %s555, 8
        %s557 = scalar_lea.vmem [#allocation6], %s556
        // Predicated region
        $region265: #{tpu_custom_call.1} parent=23 // pred_check
          %p558 = pneg %p62
        $region266: #{tpu_custom_call.1} parent=23 // pred_check_branch
          %560 = sbr.rel (%p558) target = $region268
        $region267: #{tpu_custom_call.1} parent=23 // pred_region
          %s562 = ssub.s32 128, 128
          %563 = vsyncadd %s554, %s562
          %s564 = smul.addr %s23, 128
          %s565 = scalar_lea.hbm %s3, %s564
          %s567 = sshll.u32 %s557, 4
          %s568 = int_to_ptr.vmem [resolvable:$true] %s567
          %570 = dma.vmem_to_hbm [thread:$0]  %s568, 128, %s565, %s554
        $region268: #{tpu_custom_call.1} parent=23 // pred_fallthru
          _
      $region24: #{tpu_custom_call.1} parent=5 // pred_fallthru
        _
      %p571 = scmp.le.s32.totalorder 2, %s18
      // Predicated region
      $region269: #{tpu_custom_call.1} parent=5 // pred_check
        %p572 = pneg %p571
      $region270: #{tpu_custom_call.1} parent=5 // pred_check_branch
        %574 = sbr.rel (%p572) target = $region272
      $region271: #{tpu_custom_call.1} parent=5 // pred_region
        %s575 = ssub.s32 %s18, 2
        // Predicated region
        $region273: #{tpu_custom_call.1} parent=271 // pred_check
          %p576 = pneg %p68
        $region274: #{tpu_custom_call.1} parent=271 // pred_check_branch
          %578 = sbr.rel (%p576) target = $region276
        $region275: #{tpu_custom_call.1} parent=271 // pred_region
          %s579 = sand.u32 %s53, 1
          %s580 = scalar_lea.sflag [#allocation7], %s579
          %s581 = sand.u32 %s53, 1
          %s582 = smul.addr %s581, 8
          %s583 = scalar_lea.vmem [#allocation6], %s582
          %584 = dma.done %s580, 128
        $region276: #{tpu_custom_call.1} parent=271 // pred_fallthru
          _
      $region272: #{tpu_custom_call.1} parent=5 // pred_fallthru
        _
    $region6: #{tpu_custom_call.1} parent=1 // loop_footer
      %s22 = sadd.s32 1, %s18
    $region7: #{tpu_custom_call.1} parent=1 // loop_footer_branch
      %17 = sbr.rel target = $region3
    $region8: #{tpu_custom_call.1} parent=1 // loop_exit
      _
    %585 = vsyncpa [#allocation7], 1
    %s586 = scalar_lea.sflag [#allocation7], 1
    %587 = vsyncpa %s586, 1
  %588 = vsyncmov [#allocation3]
  %s589 = vpop.sfrf %588
  %p590 = scmp.eq.s32.totalorder %s589, 0
  %p591 = pneg %p590
  %593 = shalt.err (%p591)
  %s594 = scalar_lea.sflag [#allocation3], 1
  %595 = vsyncmov %s594
  %s596 = vpop.sfrf %595
  %p597 = scmp.eq.s32.totalorder %s596, 0
  %p598 = pneg %p597
  %600 = shalt.err (%p598)
  %s601 = scalar_lea.sflag [#allocation3], 2
  %602 = vsyncmov %s601
  %s603 = vpop.sfrf %602
  %p604 = scmp.eq.s32.totalorder %s603, 0
  %p605 = pneg %p604
  %607 = shalt.err (%p605)
  %s608 = scalar_lea.sflag [#allocation3], 3
  %609 = vsyncmov %s608
  %s610 = vpop.sfrf %609
  %p611 = scmp.eq.s32.totalorder %s610, 0
  %p612 = pneg %p611
  %614 = shalt.err (%p612)
  %s615 = scalar_lea.sflag [#allocation3], 4
  %616 = vsyncmov %s615
  %s617 = vpop.sfrf %616
  %p618 = scmp.eq.s32.totalorder %s617, 0
  %p619 = pneg %p618
  %621 = shalt.err (%p619)
  %s622 = scalar_lea.sflag [#allocation3], 5
  %623 = vsyncmov %s622
  %s624 = vpop.sfrf %623
  %p625 = scmp.eq.s32.totalorder %s624, 0
  %p626 = pneg %p625
  %628 = shalt.err (%p626)
  %s629 = scalar_lea.sflag [#allocation3], 6
  %630 = vsyncmov %s629
  %s631 = vpop.sfrf %630
  %p632 = scmp.eq.s32.totalorder %s631, 0
  %p633 = pneg %p632
  %635 = shalt.err (%p633)
  %s636 = scalar_lea.sflag [#allocation3], 7
  %637 = vsyncmov %s636
  %s638 = vpop.sfrf %637
  %p639 = scmp.eq.s32.totalorder %s638, 0
  %p640 = pneg %p639
  %642 = shalt.err (%p640)

</llo_original>
